<compile_context>
chip_gen: v7x
topology: tpu7x:2x2x1
jax: 0.10.0
libtpu: 0.0.40
codegen_flags: <defaults>
</compile_context>

<pallas_src>
import functools

import jax
import jax.numpy as jnp
from jax import lax
from jax.experimental import pallas as pl
from jax.experimental.pallas import tpu as pltpu

_EPS = 1e-8        # matches nn.CosineSimilarity eps clamp
_NEG_BIG = -1e30   # "minus infinity" for the masked log-sum-exp


def _infonce_kernel(xq_ref, xk_ref, out_ref, *, inv_t, half_n, tile_m):
    n = xk_ref.shape[0]

    q = xq_ref[...].astype(jnp.float32)                       # (TM, D) query tile
    k = xk_ref[...].astype(jnp.float32)                       # (N, D)  all keys

    # cosine-normalize rows (norm clamped at eps, like nn.CosineSimilarity)
    qn = q / jnp.maximum(jnp.sqrt(jnp.sum(q * q, axis=-1, keepdims=True)), _EPS)
    kn = k / jnp.maximum(jnp.sqrt(jnp.sum(k * k, axis=-1, keepdims=True)), _EPS)

    # (TM, N) similarity block on the MXU; keys on the lane axis.
    sim = lax.dot_general(qn, kn, (((1,), (1,)), ((), ())),
                          preferred_element_type=jnp.float32) * inv_t

    row0 = pl.program_id(0) * tile_m
    row = row0 + lax.broadcasted_iota(jnp.int32, (tile_m, n), 0)
    col = lax.broadcasted_iota(jnp.int32, (tile_m, n), 1)
    pos = jnp.where(row < half_n, row + half_n, row - half_n)  # paired positive

    # exclude the self-similarity from the softmax denominator
    sim_ex = jnp.where(col == row, _NEG_BIG, sim)
    m = jnp.max(sim_ex, axis=-1, keepdims=True)
    lse = m + jnp.log(jnp.sum(jnp.exp(sim_ex - m), axis=-1, keepdims=True))
    pos_logit = jnp.sum(jnp.where(col == pos, sim, 0.0), axis=-1, keepdims=True)

    out_ref[...] = lse - pos_logit                             # (TM, 1) per-row loss


def infonce_loss(data1, data2, temperature):
    assert data1.ndim == 2 and data1.shape == data2.shape
    B, D = data1.shape
    N = 2 * B
    x = jnp.concatenate([data1, data2], axis=0).astype(jnp.float32)   # keys (N, D)

    # row tiling of the queries; pad only the query side so the key set (and
    # therefore the softmax denominator) stays exactly the N real rows.
    tile_m = N if N <= 128 else 128
    num_tiles = pl.cdiv(N, tile_m)
    n_pad = num_tiles * tile_m
    xq = x if n_pad == N else jnp.pad(x, ((0, n_pad - N), (0, 0)))

    kernel = functools.partial(
        _infonce_kernel, inv_t=1.0 / float(temperature), half_n=B, tile_m=tile_m)

    per_row = pl.pallas_call(
        kernel,
        out_shape=jax.ShapeDtypeStruct((n_pad, 1), jnp.float32),
        grid=(num_tiles,),
        in_specs=[
            pl.BlockSpec((tile_m, D), lambda i: (i, 0)),   # query row tile
            pl.BlockSpec((N, D), lambda i: (0, 0)),        # all keys, VMEM-resident
        ],
        out_specs=pl.BlockSpec((tile_m, 1), lambda i: (i, 0)),
        compiler_params=pltpu.CompilerParams(dimension_semantics=("parallel",)),
    )(xq, x)

    # mean cross-entropy over the 2B real rows (padded rows sliced off)
    return jnp.mean(per_row[:N, 0])


def infonce_ref(data1, data2, temperature):
    # Pure-JAX reference mirroring the PyTorch module.
    B, _ = data1.shape
    N = 2 * B
    x = jnp.concatenate([data1, data2], axis=0)
    xn = x / jnp.maximum(jnp.linalg.norm(x, axis=-1, keepdims=True), _EPS)
    sim = (xn @ xn.T) / temperature
    idx = jnp.arange(N)
    pos = jnp.where(idx < B, idx + B, idx - B)
    sim_ex = jnp.where(jnp.eye(N, dtype=bool), -jnp.inf, sim)
    lse = jax.scipy.special.logsumexp(sim_ex, axis=-1)
    return jnp.mean(lse - sim[idx, pos])


if __name__ == "__main__":
    key = jax.random.PRNGKey(0)
    B, D = 8, 32                 # batch per view, feature dim -> N = 2B = 16
    temperature = 0.5

    k1, k2 = jax.random.split(key)
    data1 = jax.random.normal(k1, (B, D), jnp.float32)
    data2 = jax.random.normal(k2, (B, D), jnp.float32)

    loss = infonce_loss(data1, data2, temperature)
    jax.block_until_ready(loss)

    ref = infonce_ref(data1, data2, temperature)
    assert jnp.allclose(loss, ref, rtol=1e-4, atol=1e-4), (loss, ref)
    print("KERNEL_OK")
</pallas_src>

<mosaic_0001>
module attributes {stable_mosaic.version = 11 : i64} {
  func.func @_infonce_kernel(%arg0: i32, %arg1: memref<16x32xf32, #tpu.memory_space<vmem>>, %arg2: memref<16x32xf32, #tpu.memory_space<vmem>>, %arg3: memref<16x1xf32, #tpu.memory_space<vmem>>) attributes {dimension_semantics = [#tpu.dimension_semantics<parallel>], iteration_bounds = array<i64: 1>, scalar_prefetch = 0 : i64, scratch_operands = 0 : i64, tpu.core_type = #tpu.core_type<tc>, window_params = [{transform_indices = @transform_0, window_bounds = array<i64: 16, 32>}, {pipeline_mode = #tpu.pipeline_mode<synchronous>, transform_indices = @transform_1, window_bounds = array<i64: 16, 32>}, {transform_indices = @transform_2, window_bounds = array<i64: 16, 1>}]} {
    %c0 = arith.constant 0 : index
    %c0_0 = arith.constant 0 : index
    %0 = vector.load %arg1[%c0, %c0_0] : memref<16x32xf32, #tpu.memory_space<vmem>>, vector<16x32xf32>
    %c0_1 = arith.constant 0 : index
    %c0_2 = arith.constant 0 : index
    %1 = vector.load %arg2[%c0_1, %c0_2] : memref<16x32xf32, #tpu.memory_space<vmem>>, vector<16x32xf32>
    %2 = arith.mulf %0, %0 : vector<16x32xf32>
    %cst = arith.constant dense<0.000000e+00> : vector<16xf32>
    %3 = vector.multi_reduction <add>, %2, %cst [1] : vector<16x32xf32> to vector<16xf32>
    %4 = vector.shape_cast %3 : vector<16xf32> to vector<16x1xf32>
    %5 = math.sqrt %4 : vector<16x1xf32>
    %cst_3 = arith.constant 9.99999993E-9 : f32
    %6 = vector.broadcast %cst_3 : f32 to vector<16x1xf32>
    %7 = arith.maximumf %5, %6 : vector<16x1xf32>
    %8 = vector.broadcast %7 : vector<16x1xf32> to vector<16x32xf32>
    %9 = arith.divf %0, %8 : vector<16x32xf32>
    %10 = arith.mulf %1, %1 : vector<16x32xf32>
    %cst_4 = arith.constant dense<0.000000e+00> : vector<16xf32>
    %11 = vector.multi_reduction <add>, %10, %cst_4 [1] : vector<16x32xf32> to vector<16xf32>
    %12 = vector.shape_cast %11 : vector<16xf32> to vector<16x1xf32>
    %13 = math.sqrt %12 : vector<16x1xf32>
    %cst_5 = arith.constant 9.99999993E-9 : f32
    %14 = vector.broadcast %cst_5 : f32 to vector<16x1xf32>
    %15 = arith.maximumf %13, %14 : vector<16x1xf32>
    %16 = vector.broadcast %15 : vector<16x1xf32> to vector<16x32xf32>
    %17 = arith.divf %1, %16 : vector<16x32xf32>
    %cst_6 = arith.constant dense<0.000000e+00> : vector<16x16xf32>
    %18 = tpu.matmul %9, %17, %cst_6 {dimension_numbers = #tpu.dot_dimension_numbers<[1], [1], [0], [0], [0, 0, 1, 0], [], []>} : vector<16x32xf32>, vector<16x32xf32>, vector<16x16xf32> -> vector<16x16xf32>
    %cst_7 = arith.constant 2.000000e+00 : f32
    %19 = vector.broadcast %cst_7 : f32 to vector<16x16xf32>
    %20 = arith.mulf %18, %19 : vector<16x16xf32>
    %c16_i32 = arith.constant 16 : i32
    %21 = arith.muli %arg0, %c16_i32 : i32
    %22 = tpu.iota {dimensions = array<i32: 0>} : vector<16x16xi32>
    %23 = vector.broadcast %21 : i32 to vector<16x16xi32>
    %24 = arith.addi %23, %22 : vector<16x16xi32>
    %25 = tpu.iota {dimensions = array<i32: 1>} : vector<16x16xi32>
    %c8_i32 = arith.constant 8 : i32
    %26 = vector.broadcast %c8_i32 : i32 to vector<16x16xi32>
    %27 = arith.cmpi slt, %24, %26 : vector<16x16xi32>
    %c8_i32_8 = arith.constant 8 : i32
    %28 = vector.broadcast %c8_i32_8 : i32 to vector<16x16xi32>
    %29 = arith.addi %24, %28 : vector<16x16xi32>
    %c8_i32_9 = arith.constant 8 : i32
    %30 = vector.broadcast %c8_i32_9 : i32 to vector<16x16xi32>
    %31 = arith.subi %24, %30 : vector<16x16xi32>
    %32 = arith.select %27, %29, %31 : vector<16x16xi1>, vector<16x16xi32>
    %33 = arith.cmpi eq, %25, %24 : vector<16x16xi32>
    %cst_10 = arith.constant -1.000000e+30 : f32
    %34 = vector.broadcast %cst_10 : f32 to vector<16x16xf32>
    %35 = arith.select %33, %34, %20 : vector<16x16xi1>, vector<16x16xf32>
    %cst_11 = arith.constant dense<0xFF800000> : vector<16xf32>
    %36 = vector.multi_reduction <maximumf>, %35, %cst_11 [1] : vector<16x16xf32> to vector<16xf32>
    %37 = vector.shape_cast %36 : vector<16xf32> to vector<16x1xf32>
    %38 = vector.broadcast %37 : vector<16x1xf32> to vector<16x16xf32>
    %39 = arith.subf %35, %38 : vector<16x16xf32>
    %40 = math.exp %39 : vector<16x16xf32>
    %cst_12 = arith.constant dense<0.000000e+00> : vector<16xf32>
    %41 = vector.multi_reduction <add>, %40, %cst_12 [1] : vector<16x16xf32> to vector<16xf32>
    %42 = vector.shape_cast %41 : vector<16xf32> to vector<16x1xf32>
    %43 = math.log %42 : vector<16x1xf32>
    %44 = arith.addf %37, %43 : vector<16x1xf32>
    %45 = arith.cmpi eq, %25, %32 : vector<16x16xi32>
    %cst_13 = arith.constant 0.000000e+00 : f32
    %46 = vector.broadcast %cst_13 : f32 to vector<16x16xf32>
    %47 = arith.select %45, %20, %46 : vector<16x16xi1>, vector<16x16xf32>
    %cst_14 = arith.constant dense<0.000000e+00> : vector<16xf32>
    %48 = vector.multi_reduction <add>, %47, %cst_14 [1] : vector<16x16xf32> to vector<16xf32>
    %49 = vector.shape_cast %48 : vector<16xf32> to vector<16x1xf32>
    %50 = arith.subf %44, %49 : vector<16x1xf32>
    %c0_15 = arith.constant 0 : index
    %c0_16 = arith.constant 0 : index
    %51 = vector.load %arg3[%c0_15, %c0_16] : memref<16x1xf32, #tpu.memory_space<vmem>>, vector<16x1xf32>
    tpu.vector_store %arg3[%c0_15, %c0_16], %50 {strides = array<i32>} : memref<16x1xf32, #tpu.memory_space<vmem>>, vector<16x1xf32>,
    return
  }
  func.func @transform_0(%arg0: i32) -> (i32, i32) {
    %c0_i32 = arith.constant 0 : i32
    %c0_i32_0 = arith.constant 0 : i32
    return %arg0, %c0_i32 : i32, i32
  }
  func.func @transform_1(%arg0: i32) -> (i32, i32) {
    %c0_i32 = arith.constant 0 : i32
    %c0_i32_0 = arith.constant 0 : i32
    %c0_i32_1 = arith.constant 0 : i32
    return %c0_i32, %c0_i32_0 : i32, i32
  }
  func.func @transform_2(%arg0: i32) -> (i32, i32) {
    %c0_i32 = arith.constant 0 : i32
    %c0_i32_0 = arith.constant 0 : i32
    return %arg0, %c0_i32 : i32, i32
  }
}

</mosaic_0001>

<llo_original>
// kernel: tpu_custom_call.1
$region0: #{tpu_custom_call.1}
  #allocation0 [shape = 'u32[]', space=smem, size = 0x4, offset = 0x4, fixed_abs, tag = 'smem constant byte address 0x4 - core index']
  #allocation1 [shape = 'u32[144,128]{1,0:T(1,128)}', space=vmem, size = 0x12000, scoped, tag = 'internal scratch']
  %s0 = inlined_call_operand.hbm [shape: f32[16,32], index: 0, kind: input, shape index: {}]
  %s1 = inlined_call_operand.hbm [shape: f32[16,32], index: 1, kind: input, shape index: {}]
  %s2 = inlined_call_operand.vmem [shape: f32[16,1], index: 2, kind: output, shape index: {}]
  %s3 = sld [smem:[#allocation0]]
  $region26: #{tpu_custom_call.1} parent=0
    _
  %s5 = ssub.s32 1, %s3
  %s6 = scalar_select 0, %s5, %s3
  $region1: #{tpu_custom_call.1} parent=0
    #allocation2 [shape = 'u8[8192]{0}', space=vmem, size = 0x2000, scoped, tag = 'input window, operand 0, single buffered']
    #allocation3 [shape = 's32[1]{0}', space=sflag, size = 0x4, scoped, tag = 'scoped memory for tpu_custom_call.1']
    #allocation4 [shape = 'u8[8192]{0}', space=vmem, size = 0x2000, scoped, tag = 'input window, operand 1, single buffered']
    #allocation5 [shape = 's32[1]{0}', space=sflag, size = 0x4, scoped, tag = 'scoped memory for tpu_custom_call.1']
    %7 = vsyncpa [#allocation3], 0
    %8 = vsyncpa [#allocation5], 0
    // Predicated region
    $region2: #{tpu_custom_call.1} parent=1 // pred_check
      _
    $region3: #{tpu_custom_call.1} parent=1 // pred_check_branch
      %10 = sbr.rel (0) target = $region5
    $region4: #{tpu_custom_call.1} parent=1 // pred_region
      %s12 = ssub.s32 256, 256
      %13 = vsyncadd [#allocation3], %s12
      %s14 = sshll.u32 [#allocation2], 4
      %s15 = int_to_ptr.vmem [resolvable:$true] %s14
      %20 = dma.hbm_to_vmem [thread:$0]  %s0, 256, %s15, [#allocation3], 128, 128, 8
    $region5: #{tpu_custom_call.1} parent=1 // pred_fallthru
      _
    // Predicated region
    $region6: #{tpu_custom_call.1} parent=1 // pred_check
      _
    $region7: #{tpu_custom_call.1} parent=1 // pred_check_branch
      %22 = sbr.rel (0) target = $region9
    $region8: #{tpu_custom_call.1} parent=1 // pred_region
      %s24 = ssub.s32 256, 256
      %25 = vsyncadd [#allocation5], %s24
      %s26 = sshll.u32 [#allocation4], 4
      %s27 = int_to_ptr.vmem [resolvable:$true] %s26
      %32 = dma.hbm_to_vmem [thread:$0]  %s1, 256, %s27, [#allocation5], 128, 128, 8
    $region9: #{tpu_custom_call.1} parent=1 // pred_fallthru
      _
    // Predicated region
    $region10: #{tpu_custom_call.1} parent=1 // pred_check
      _
    $region11: #{tpu_custom_call.1} parent=1 // pred_check_branch
      %34 = sbr.rel (0) target = $region13
    $region12: #{tpu_custom_call.1} parent=1 // pred_region
      %35 = dma.done [#allocation3], 256
    $region13: #{tpu_custom_call.1} parent=1 // pred_fallthru
      _
    // Predicated region
    $region14: #{tpu_custom_call.1} parent=1 // pred_check
      _
    $region15: #{tpu_custom_call.1} parent=1 // pred_check_branch
      %37 = sbr.rel (0) target = $region17
    $region16: #{tpu_custom_call.1} parent=1 // pred_region
      %38 = dma.done [#allocation5], 256
    $region17: #{tpu_custom_call.1} parent=1 // pred_fallthru
      _
    %v39 = vld [vmem:[#allocation2] sm:$0xff]
    %v40 = vld [vmem:[#allocation2 + $0x8] sm:$0xff]
    %v41 = vld [vmem:[#allocation4] sm:$0xff]
    %v42 = vld [vmem:[#allocation4 + $0x8] sm:$0xff]
    %v43 = vmul.f32 %v39, %v39
    %v44 = vmul.f32 %v40, %v40
    %vm45 = vcmask 261120
    %v46 = vsel %vm45, %v43, 0.0
    %47 = vadd.xlane.f32.xlu0 %v46
    %v48 = vpop.xlane.xlu0 %47
    %v49 = vsel %vm45, %v44, 0.0
    %50 = vadd.xlane.f32.xlu0 %v49
    %v51 = vpop.xlane.xlu0 %50
    %v52 = vrsqrt.pop %v48
    %v53 = vmul.f32 %v48, %v52
    %vm54 = vcmp.eq.f32.partialorder %v48, inf
    %v55 = vsel %vm54, %v48, %v53
    %vm56 = vcmp.eq.f32.partialorder %v48, 0.0
    %v57 = vand.u32 %v48, 2147483648
    %v58 = vsel %vm56, %v57, %v55
    %v59 = vrsqrt.pop %v51
    %v60 = vmul.f32 %v51, %v59
    %vm61 = vcmp.eq.f32.partialorder %v51, inf
    %v62 = vsel %vm61, %v51, %v60
    %vm63 = vcmp.eq.f32.partialorder %v51, 0.0
    %v64 = vand.u32 %v51, 2147483648
    %v65 = vsel %vm63, %v64, %v62
    %v66 = vmax.f32 %v58, 1e-08
    %v67 = vmax.f32 %v65, 1e-08
    %v68 = vrcp.pop %v66
    %v69 = vmul.f32 %v39, %v68
    %v70 = vrcp.pop %v67
    %v71 = vmul.f32 %v40, %v70
    %v72 = vmul.f32 %v41, %v41
    %v73 = vmul.f32 %v42, %v42
    %v74 = vsel %vm45, %v72, 0.0
    %75 = vadd.xlane.f32.xlu0 %v74
    %v76 = vpop.xlane.xlu0 %75
    %v77 = vsel %vm45, %v73, 0.0
    %78 = vadd.xlane.f32.xlu0 %v77
    %v79 = vpop.xlane.xlu0 %78
    %v80 = vrsqrt.pop %v76
    %v81 = vmul.f32 %v76, %v80
    %vm82 = vcmp.eq.f32.partialorder %v76, inf
    %v83 = vsel %vm82, %v76, %v81
    %vm84 = vcmp.eq.f32.partialorder %v76, 0.0
    %v85 = vand.u32 %v76, 2147483648
    %v86 = vsel %vm84, %v85, %v83
    %v87 = vrsqrt.pop %v79
    %v88 = vmul.f32 %v79, %v87
    %vm89 = vcmp.eq.f32.partialorder %v79, inf
    %v90 = vsel %vm89, %v79, %v88
    %vm91 = vcmp.eq.f32.partialorder %v79, 0.0
    %v92 = vand.u32 %v79, 2147483648
    %v93 = vsel %vm91, %v92, %v90
    %v94 = vmax.f32 %v86, 1e-08
    %v95 = vmax.f32 %v93, 1e-08
    %v96 = vrcp.pop %v94
    %v97 = vmul.f32 %v41, %v96
    %v98 = vrcp.pop %v95
    %v99 = vmul.f32 %v42, %v98
    %v101 = vsel %vm45, %v69, 0
    %v104 = vsel %vm45, %v71, 0
    %v107 = vsel %vm45, %v97, 0
    %v110 = vsel %vm45, %v99, 0
    %112 = vmatprep.subr.mxu0 0.0
    %113 = vmatpush1.xpose.msra.mxu0 %v107
    %114 = vmatprep.subr.mxu0 0.0
    %115 = vmatpush1.xpose.msra.mxu0 %v110
    %116 = vmatprep.subr.mxu0 0.0
    %117 = vmatpush1.xpose.msra.mxu0 0.0
    %118 = vmatprep.subr.mxu0 0.0
    %119 = vmatpush1.xpose.msra.mxu0 0.0
    %120 = vmatprep.subr.mxu0 0.0
    %121 = vmatpush1.xpose.msra.mxu0 0.0
    %122 = vmatprep.subr.mxu0 0.0
    %123 = vmatpush1.xpose.msra.mxu0 0.0
    %124 = vmatprep.subr.mxu0 0.0
    %125 = vmatpush1.xpose.msra.mxu0 0.0
    %126 = vmatprep.subr.mxu0 0.0
    %127 = vmatpush1.xpose.msra.mxu0 0.0
    %128 = vmatprep.subr.mxu0 0.0
    %129 = vmatpush1.xpose.msra.mxu0 0.0
    %130 = vmatprep.subr.mxu0 0.0
    %131 = vmatpush1.xpose.msra.mxu0 0.0
    %132 = vmatprep.subr.mxu0 0.0
    %133 = vmatpush1.xpose.msra.mxu0 0.0
    %134 = vmatprep.subr.mxu0 0.0
    %135 = vmatpush1.xpose.msra.mxu0 0.0
    %136 = vmatprep.subr.mxu0 0.0
    %137 = vmatpush1.xpose.msra.mxu0 0.0
    %138 = vmatprep.subr.mxu0 0.0
    %139 = vmatpush1.xpose.msra.mxu0 0.0
    %140 = vmatprep.subr.mxu0 0.0
    %141 = vmatpush1.xpose.msra.mxu0 0.0
    %142 = vmatprep.subr.mxu0 0.0
    %143 = vmatpush1.xpose.msra.mxu0 0.0
    %144 = vmatprep.subr.mxu0 0.0
    %145 = vmatpush1.xpose.msra.mxu0 0.0
    %146 = vmatprep.subr.mxu0 0.0
    %147 = vmatpush1.xpose.msra.mxu0 0.0
    %148 = vmatprep.subr.mxu0 0.0
    %149 = vmatpush1.xpose.msra.mxu0 0.0
    %150 = vmatprep.subr.mxu0 0.0
    %151 = vmatpush1.xpose.msra.mxu0 0.0
    %152 = vmatprep.subr.mxu0 0.0
    %153 = vmatpush1.xpose.msra.mxu0 0.0
    %154 = vmatprep.subr.mxu0 0.0
    %155 = vmatpush1.xpose.msra.mxu0 0.0
    %156 = vmatprep.subr.mxu0 0.0
    %157 = vmatpush1.xpose.msra.mxu0 0.0
    %158 = vmatprep.subr.mxu0 0.0
    %159 = vmatpush1.xpose.msra.mxu0 0.0
    %160 = vmatprep.subr.mxu0 0.0
    %161 = vmatpush1.xpose.msra.mxu0 0.0
    %162 = vmatprep.subr.mxu0 0.0
    %163 = vmatpush1.xpose.msra.mxu0 0.0
    %164 = vmatprep.subr.mxu0 0.0
    %165 = vmatpush1.xpose.msra.mxu0 0.0
    %166 = vmatprep.subr.mxu0 0.0
    %167 = vmatpush1.xpose.msra.mxu0 0.0
    %168 = vmatprep.subr.mxu0 0.0
    %169 = vmatpush1.xpose.msra.mxu0 0.0
    %170 = vmatprep.subr.mxu0 0.0
    %171 = vmatpush1.xpose.msra.mxu0 0.0
    %172 = vmatprep.subr.mxu0 0.0
    %173 = vmatpush1.xpose.msra.mxu0 0.0
    %174 = vmatprep.subr.mxu0 0.0
    %175 = vmatpush1.xpose.msra.mxu0 0.0
    %176 = vmatprep.mubr.f32.mxu0 0.0
    %177 = vmatmul.mubr.f32.gmra.mrb[0].mxu0 %v101
    %v178 = vpop.f32.mrb[0].mxu0
    %v179 = vadd.f32 0.0, %v178
    %v180 = vpop.f32.mrb[0].mxu0
    %181 = vmatprep.mubr.f32.mxu0 0.0
    %182 = vmatmul.mubr.f32.gmra.mrb[0].mxu0 %v104
    %v183 = vpop.f32.mrb[0].mxu0
    %v184 = vadd.f32 0.0, %v183
    %v185 = vpop.f32.mrb[0].mxu0
    %186 = vdwg.mxu0
    %v187 = vmul.f32 %v179, 2.0
    %v188 = vmul.f32 %v184, 2.0
    %s189 = smul.u32 0, 16
    %v190 = vlaneseq
    %v191 = vshrl.u32 %v190, 7
    %v192 = vadd.s32 %v191, 8
    %v193 = vstv %s189
    %v194 = vadd.s32 %v193, %v191
    %v195 = vadd.s32 %v193, %v192
    %v196 = vlaneseq
    %v197 = vand.u32 %v196, 127
    %vm198 = vcmp.lt.s32.totalorder %v194, 8
    %vm199 = vcmp.lt.s32.totalorder %v195, 8
    %v200 = vadd.s32 %v194, 8
    %v201 = vadd.s32 %v195, 8
    %v202 = vsub.s32 %v194, 8
    %v203 = vsub.s32 %v195, 8
    %v204 = vsel %vm198, %v200, %v202
    %v205 = vsel %vm199, %v201, %v203
    %vm206 = vcmp.eq.s32.totalorder %v197, %v194
    %vm207 = vcmp.eq.s32.totalorder %v197, %v195
    %v208 = vsel %vm206, -1e+30, %v187
    %v209 = vsel %vm207, -1e+30, %v188
    %vm210 = vcmask 130048
    %v211 = vsel %vm210, %v208, -inf
    %212 = vmax.xlane.f32.xlu0 %v211
    %v213 = vpop.xlane.xlu0 %212
    %v214 = vsel %vm210, %v209, -inf
    %215 = vmax.xlane.f32.xlu0 %v214
    %v216 = vpop.xlane.xlu0 %215
    %v217 = vsub.f32 %v208, %v213
    %v218 = vsub.f32 %v209, %v216
    %v219 = vmul.f32 %v217, 1.442695
    %v220 = vpow.pop %v219
    %v221 = vmul.f32 %v218, 1.442695
    %v222 = vpow.pop %v221
    %v223 = vsel %vm210, %v220, 0.0
    %224 = vadd.xlane.f32.xlu0 %v223
    %v225 = vpop.xlane.xlu0 %224
    %v226 = vsel %vm210, %v222, 0.0
    %227 = vadd.xlane.f32.xlu0 %v226
    %v228 = vpop.xlane.xlu0 %227
    %v229 = vlog2.pop %v225
    %v230 = vmul.f32 %v229, 0.6931472
    %v231 = vlog2.pop %v228
    %v232 = vmul.f32 %v231, 0.6931472
    %v233 = vadd.f32 %v213, %v230
    %v234 = vadd.f32 %v216, %v232
    %vm235 = vcmp.eq.s32.totalorder %v197, %v204
    %vm236 = vcmp.eq.s32.totalorder %v197, %v205
    %v237 = vsel %vm235, %v187, 0.0
    %v238 = vsel %vm236, %v188, 0.0
    %v239 = vsel %vm210, %v237, 0.0
    %240 = vadd.xlane.f32.xlu0 %v239
    %v241 = vpop.xlane.xlu0 %240
    %v242 = vsel %vm210, %v238, 0.0
    %243 = vadd.xlane.f32.xlu0 %v242
    %v244 = vpop.xlane.xlu0 %243
    %v245 = vsub.f32 %v233, %v241
    %v246 = vsub.f32 %v234, %v244
    %vm247 = vcmask 7168
    %248 = vst.msk [vmem:[%s2] sm:$0xff] %vm247, %v245
    %249 = vst.msk [vmem:[%s2 + $0x8] sm:$0xff] %vm247, %v246
    // Predicated region
    $region18: #{tpu_custom_call.1} parent=1 // pred_check
      _
    $region19: #{tpu_custom_call.1} parent=1 // pred_check_branch
      %251 = sbr.rel (0) target = $region21
    $region20: #{tpu_custom_call.1} parent=1 // pred_region
      _
    $region21: #{tpu_custom_call.1} parent=1 // pred_fallthru
      _
    // Predicated region
    $region22: #{tpu_custom_call.1} parent=1 // pred_check
      _
    $region23: #{tpu_custom_call.1} parent=1 // pred_check_branch
      %253 = sbr.rel (0) target = $region25
    $region24: #{tpu_custom_call.1} parent=1 // pred_region
      _
    $region25: #{tpu_custom_call.1} parent=1 // pred_fallthru
      _
    %254 = vsyncpa [#allocation3], 1
    %255 = vsyncpa [#allocation5], 1

</llo_original>
